<compile_context>
chip_gen: v6e
topology: v6e:2x2x1
jax: 0.10.0
libtpu: 0.0.40
codegen_flags: <defaults>
</compile_context>

<pallas_src>
import functools

import jax
import jax.numpy as jnp
from jax.experimental import pallas as pl
from jax.experimental.pallas import tpu as pltpu


def _round_up(x: int, m: int) -> int:
    return ((x + m - 1) // m) * m


def _linear_kernel(x_ref, w_ref, b_ref, o_ref):
    # x_ref: (tm, tk) f32, w_ref: (tk, tn) bf16, b_ref: (1, tn) f32,
    # o_ref: (tm, tn) f32 -- resident across the K (reduction) grid axis.
    @pl.when(pl.program_id(2) == 0)
    def _init():
        # Seed the resident output tile with the bias; every K step then
        # accumulates straight into it (no scratch, no separate epilogue).
        o_ref[...] = jnp.broadcast_to(b_ref[...], o_ref.shape)

    # In-kernel cast of the f32 x tile to the weight compute dtype (bf16):
    # free VPU work in an MXU/DMA-bound kernel, halves the x HBM stream vs.
    # a wrapper-side cast+pad.
    o_ref[...] += jnp.dot(
        x_ref[...].astype(w_ref.dtype),
        w_ref[...],
        preferred_element_type=jnp.float32,
    )


@functools.partial(jax.jit, static_argnums=(3, 4, 5, 6))
def _forward(x, w_p, b_p, n_features, n_classes, tn, tk):
    B, F = x.shape
    assert F == n_features, "feature-count mismatch"
    Fp, Cp = w_p.shape

    # Sublane tile: multiple of 16 (bf16 row packing), capped at 256 for MXU
    # occupancy (decomposes cleanly on v5e's 128-wide MXU too).
    tm = min(256, _round_up(B, 16))
    Bp = _round_up(B, tm)

    # Pad x (kept f32) only when the shape actually requires it.
    if (Bp, Fp) != (B, F):
        x_p = jnp.pad(x, ((0, Bp - B), (0, Fp - F)))
    else:
        x_p = x

    grid = (Bp // tm, Cp // tn, Fp // tk)
    n_i, n_j = grid[0], grid[1]

    # Advisory cost for XLA's scheduler: count the real grid re-streaming
    # (x re-read once per j block, W re-read once per i block).
    bytes_accessed = (
        x_p.size * x_p.dtype.itemsize * n_j
        + w_p.size * w_p.dtype.itemsize * n_i
        + b_p.size * b_p.dtype.itemsize * n_i
        + Bp * Cp * 4
    )
    cost = pl.CostEstimate(
        flops=2 * Bp * Fp * Cp, transcendentals=0, bytes_accessed=bytes_accessed
    )

    out_p = pl.pallas_call(
        _linear_kernel,
        out_shape=jax.ShapeDtypeStruct((Bp, Cp), jnp.float32),
        grid=grid,
        in_specs=[
            pl.BlockSpec((tm, tk), lambda i, j, k: (i, k)),  # x tile (f32)
            pl.BlockSpec((tk, tn), lambda i, j, k: (k, j)),  # W.T tile (bf16)
            pl.BlockSpec((1, tn), lambda i, j, k: (0, j)),   # bias tile (f32)
        ],
        out_specs=pl.BlockSpec((tm, tn), lambda i, j, k: (i, j)),
        compiler_params=pltpu.CompilerParams(
            dimension_semantics=("parallel", "parallel", "arbitrary"),
            vmem_limit_bytes=32 * 1024 * 1024,
        ),
        cost_estimate=cost,
    )(x_p, w_p, b_p)

    # Slice padding off only when padding actually happened.
    if (Bp, Cp) != (B, n_classes):
        return out_p[:B, :n_classes]
    return out_p


class PallasLogisticRegression:
    """y = x @ W.T + b (torch.nn.Linear semantics).

    All static parameter layout work (transpose, cast, pad) happens once at
    construction; the per-call path only (maybe) pads x and runs the kernel.
    """

    def __init__(self, weight, bias, compute_dtype=jnp.bfloat16):
        self.n_classes, self.n_features = weight.shape

        # Output-lane tile (multiple of 128, up to 512) and contraction tile
        # (multiple of 128, up to 2048).  Worst-case double-buffered VMEM:
        #   x (256x2048 f32)*2 + W (2048x512 bf16)*2 + out (256x512 f32)
        #   ~= 9 MiB  << 32 MiB scoped limit on v5e/v6e/v7x.
        self.tn = min(512, _round_up(self.n_classes, 128))
        self.tk = min(2048, _round_up(self.n_features, 128))
        Cp = _round_up(self.n_classes, self.tn)
        Fp = _round_up(self.n_features, self.tk)

        # One-time layout plumbing: W -> (F, C) bf16, zero-padded; bias -> f32
        # row, zero-padded.  Zero padding along K contributes 0 to the dot.
        w_t = jnp.asarray(weight).T.astype(compute_dtype)
        if (Fp, Cp) != (self.n_features, self.n_classes):
            w_t = jnp.pad(
                w_t, ((0, Fp - self.n_features), (0, Cp - self.n_classes))
            )
        b = jnp.asarray(bias, dtype=jnp.float32).reshape(1, self.n_classes)
        if Cp != self.n_classes:
            b = jnp.pad(b, ((0, 0), (0, Cp - self.n_classes)))

        self.w_p = jax.device_put(w_t)
        self.b_p = jax.device_put(b)

    def __call__(self, x):
        return _forward(
            x,
            self.w_p,
            self.b_p,
            self.n_features,
            self.n_classes,
            self.tn,
            self.tk,
        )


if __name__ == "__main__":
    key = jax.random.PRNGKey(0)
    k_x, k_w, k_b = jax.random.split(key, 3)

    batch = 8
    n_features = 32
    n_classes = 16

    # Deterministic "parameter init" mimicking nn.Linear's
    # uniform(-1/sqrt(F), 1/sqrt(F)).
    bound = 1.0 / (n_features ** 0.5)
    weight = jax.random.uniform(
        k_w, (n_classes, n_features), minval=-bound, maxval=bound,
        dtype=jnp.float32,
    )
    bias = jax.random.uniform(
        k_b, (n_classes,), minval=-bound, maxval=bound, dtype=jnp.float32
    )
    x = jax.random.normal(k_x, (batch, n_features), dtype=jnp.float32)

    model = PallasLogisticRegression(weight, bias)
    y = model(x)
    jax.block_until_ready(y)

    # Reference check (bf16 MXU compute inside kernel -> loosened tolerance).
    y_ref = x @ weight.T + bias
    assert y.shape == y_ref.shape, "shape mismatch vs reference"
    assert jnp.allclose(y, y_ref, atol=3e-2, rtol=3e-2), "mismatch vs reference"

    print("KERNEL_OK")
</pallas_src>

<mosaic_0001>
module attributes {stable_mosaic.version = 11 : i64} {
  func.func @_linear_kernel(%arg0: i32, %arg1: i32, %arg2: i32, %arg3: memref<16x128xf32, #tpu.memory_space<vmem>>, %arg4: memref<128x128xbf16, #tpu.memory_space<vmem>>, %arg5: memref<1x128xf32, #tpu.memory_space<vmem>>, %arg6: memref<16x128xf32, #tpu.memory_space<vmem>>) attributes {dimension_semantics = [#tpu.dimension_semantics<parallel>, #tpu.dimension_semantics<parallel>, #tpu.dimension_semantics<arbitrary>], iteration_bounds = array<i64: 1, 1, 1>, scalar_prefetch = 0 : i64, scratch_operands = 0 : i64, tpu.core_type = #tpu.core_type<tc>, window_params = [{transform_indices = @transform_0, window_bounds = array<i64: 16, 128>}, {transform_indices = @transform_1, window_bounds = array<i64: 128, 128>}, {transform_indices = @transform_2, window_bounds = array<i64: 1, 128>}, {transform_indices = @transform_3, window_bounds = array<i64: 16, 128>}]} {
    %c0_i32 = arith.constant 0 : i32
    %0 = arith.cmpi eq, %arg2, %c0_i32 : i32
    %1 = arith.extui %0 : i1 to i32
    %c0_i32_0 = arith.constant 0 : i32
    %2 = arith.cmpi ne, %1, %c0_i32_0 : i32
    scf.if %2 {
      %c0_8 = arith.constant 0 : index
      %c0_9 = arith.constant 0 : index
      %10 = vector.load %arg5[%c0_8, %c0_9] : memref<1x128xf32, #tpu.memory_space<vmem>>, vector<1x128xf32>
      %11 = vector.shape_cast %10 : vector<1x128xf32> to vector<1x128xf32>
      %12 = vector.broadcast %11 : vector<1x128xf32> to vector<16x128xf32>
      %c0_10 = arith.constant 0 : index
      %c0_11 = arith.constant 0 : index
      %13 = vector.load %arg6[%c0_10, %c0_11] : memref<16x128xf32, #tpu.memory_space<vmem>>, vector<16x128xf32>
      tpu.vector_store %arg6[%c0_10, %c0_11], %12 {strides = array<i32>} : memref<16x128xf32, #tpu.memory_space<vmem>>, vector<16x128xf32>,
    } else {
    }
    %c0 = arith.constant 0 : index
    %c0_1 = arith.constant 0 : index
    %3 = vector.load %arg6[%c0, %c0_1] : memref<16x128xf32, #tpu.memory_space<vmem>>, vector<16x128xf32>
    %c0_2 = arith.constant 0 : index
    %c0_3 = arith.constant 0 : index
    %4 = vector.load %arg3[%c0_2, %c0_3] : memref<16x128xf32, #tpu.memory_space<vmem>>, vector<16x128xf32>
    %5 = arith.truncf %4 : vector<16x128xf32> to vector<16x128xbf16>
    %c0_4 = arith.constant 0 : index
    %c0_5 = arith.constant 0 : index
    %6 = vector.load %arg4[%c0_4, %c0_5] : memref<128x128xbf16, #tpu.memory_space<vmem>>, vector<128x128xbf16>
    %cst = arith.constant dense<0.000000e+00> : vector<16x128xf32>
    %7 = tpu.matmul %5, %6, %cst {dimension_numbers = #tpu.dot_dimension_numbers<[1], [0], [0], [1], [0, 0, 1, 1], [], []>} : vector<16x128xbf16>, vector<128x128xbf16>, vector<16x128xf32> -> vector<16x128xf32>
    %8 = arith.addf %3, %7 : vector<16x128xf32>
    %c0_6 = arith.constant 0 : index
    %c0_7 = arith.constant 0 : index
    %9 = vector.load %arg6[%c0_6, %c0_7] : memref<16x128xf32, #tpu.memory_space<vmem>>, vector<16x128xf32>
    tpu.vector_store %arg6[%c0_6, %c0_7], %8 {strides = array<i32>} : memref<16x128xf32, #tpu.memory_space<vmem>>, vector<16x128xf32>,
    return
  }
  func.func @transform_0(%arg0: i32, %arg1: i32, %arg2: i32) -> (i32, i32) {
    %c0_i32 = arith.constant 0 : i32
    return %arg0, %arg2 : i32, i32
  }
  func.func @transform_1(%arg0: i32, %arg1: i32, %arg2: i32) -> (i32, i32) {
    %c0_i32 = arith.constant 0 : i32
    return %arg2, %arg1 : i32, i32
  }
  func.func @transform_2(%arg0: i32, %arg1: i32, %arg2: i32) -> (i32, i32) {
    %c0_i32 = arith.constant 0 : i32
    %c0_i32_0 = arith.constant 0 : i32
    return %c0_i32, %arg1 : i32, i32
  }
  func.func @transform_3(%arg0: i32, %arg1: i32, %arg2: i32) -> (i32, i32) {
    %c0_i32 = arith.constant 0 : i32
    return %arg0, %arg1 : i32, i32
  }
}

</mosaic_0001>

<llo_original>
// kernel: _forward.1
$region0: #{_forward.1}
  #allocation0 [shape = 'u32[]', space=smem, size = 0x4, offset = 0x4, fixed_abs, tag = 'smem constant byte address 0x4 - core index']
  #allocation1 [shape = 'u32[144,128]{1,0:T(1,128)}', space=vmem, size = 0x12000, scoped, tag = 'internal scratch']
  %s0 = inlined_call_operand.vmem [shape: f32[16,128], index: 0, kind: input, shape index: {}]
  %s1 = inlined_call_operand.hbm [shape: bf16[128,128], index: 1, kind: input, shape index: {}]
  %s2 = inlined_call_operand.vmem [shape: f32[1,128], index: 2, kind: input, shape index: {}]
  %s3 = inlined_call_operand.vmem [shape: f32[16,128], index: 3, kind: output, shape index: {}]
  %s4 = sld [smem:[#allocation0]]
  $region30: #{_forward.1} parent=0
    _
  %s6 = ssub.s32 1, %s4
  %s7 = scalar_select 0, %s6, %s4
  $region1: #{_forward.1} parent=0
    #allocation2 [shape = 'u8[32768]{0}', space=vmem, size = 0x8000, scoped, tag = 'input window, operand 1, single buffered']
    #allocation3 [shape = 's32[1]{0}', space=sflag, size = 0x4, scoped, tag = 'scoped memory for _forward.1']
    %8 = vsyncpa [#allocation3], 0
    // Predicated region
    $region2: #{_forward.1} parent=1 // pred_check
      _
    $region3: #{_forward.1} parent=1 // pred_check_branch
      %10 = sbr.rel (0) target = $region5
    $region4: #{_forward.1} parent=1 // pred_region
      _
    $region5: #{_forward.1} parent=1 // pred_fallthru
      _
    // Predicated region
    $region6: #{_forward.1} parent=1 // pred_check
      _
    $region7: #{_forward.1} parent=1 // pred_check_branch
      %12 = sbr.rel (0) target = $region9
    $region8: #{_forward.1} parent=1 // pred_region
      %s14 = ssub.s32 1024, 1024
      %15 = vsyncadd [#allocation3], %s14
      %s16 = sshll.u32 [#allocation2], 4
      %s17 = int_to_ptr.vmem [resolvable:$true] %s16
      %22 = dma.hbm_to_vmem [thread:$0]  %s1, 1024, %s17, [#allocation3], 64, 64, 4
    $region9: #{_forward.1} parent=1 // pred_fallthru
      _
    // Predicated region
    $region10: #{_forward.1} parent=1 // pred_check
      _
    $region11: #{_forward.1} parent=1 // pred_check_branch
      %24 = sbr.rel (0) target = $region13
    $region12: #{_forward.1} parent=1 // pred_region
      _
    $region13: #{_forward.1} parent=1 // pred_fallthru
      _
    // Predicated region
    $region14: #{_forward.1} parent=1 // pred_check
      _
    $region15: #{_forward.1} parent=1 // pred_check_branch
      %26 = sbr.rel (0) target = $region17
    $region16: #{_forward.1} parent=1 // pred_region
      %27 = dma.done [#allocation3], 1024
    $region17: #{_forward.1} parent=1 // pred_fallthru
      _
    %p29 = scmp.eq.s32.totalorder 0, 0
    // Predicated region
    $region18: #{_forward.1} parent=1 // pred_check
      %p30 = pneg %p29
    $region19: #{_forward.1} parent=1 // pred_check_branch
      %32 = sbr.rel (%p30) target = $region21
    $region20: #{_forward.1} parent=1 // pred_region
      %v33 = vld [vmem:[%s2] sm:$0x1]
      %v35 = vlaneseq
      %v36 = vshrl.u32 %v35, 7
      %v37 = vsub.s32 0, %v36
      %v38 = vrot.slane %v33, %v37
      %40 = vst [vmem:[%s3] sm:$0xff] %v38
      %41 = vst [vmem:[%s3 + $0x8] sm:$0xff] %v38
    $region21: #{_forward.1} parent=1 // pred_fallthru
      _
    %v42 = vld [vmem:[%s3] sm:$0xff]
    %v43 = vld [vmem:[%s3 + $0x8] sm:$0xff]
    %v44 = vld [vmem:[%s0] sm:$0xff]
    %v45 = vld [vmem:[%s0 + $0x8] sm:$0xff]
    %v46 = vpack.c.bf16 %v45, %v44
    %v47 = vld [vmem:[#allocation2] sm:$0xf]
    %v48 = vld [vmem:[#allocation2 + $0x4] sm:$0xf]
    %v49 = vld [vmem:[#allocation2 + $0x8] sm:$0xf]
    %v50 = vld [vmem:[#allocation2 + $0xc] sm:$0xf]
    %v51 = vld [vmem:[#allocation2 + $0x10] sm:$0xf]
    %v52 = vld [vmem:[#allocation2 + $0x14] sm:$0xf]
    %v53 = vld [vmem:[#allocation2 + $0x18] sm:$0xf]
    %v54 = vld [vmem:[#allocation2 + $0x1c] sm:$0xf]
    %v55 = vld [vmem:[#allocation2 + $0x20] sm:$0xf]
    %v56 = vld [vmem:[#allocation2 + $0x24] sm:$0xf]
    %v57 = vld [vmem:[#allocation2 + $0x28] sm:$0xf]
    %v58 = vld [vmem:[#allocation2 + $0x2c] sm:$0xf]
    %v59 = vld [vmem:[#allocation2 + $0x30] sm:$0xf]
    %v60 = vld [vmem:[#allocation2 + $0x34] sm:$0xf]
    %v61 = vld [vmem:[#allocation2 + $0x38] sm:$0xf]
    %v62 = vld [vmem:[#allocation2 + $0x3c] sm:$0xf]
    %v79 = vunpack.c.l.b16 %v47
    %v80 = vunpack.c.l.b16 %v48
    %v81 = vunpack.c.l.b16 %v49
    %v82 = vunpack.c.l.b16 %v50
    %v83 = vunpack.c.l.b16 %v51
    %v84 = vunpack.c.l.b16 %v52
    %v85 = vunpack.c.l.b16 %v53
    %v86 = vunpack.c.l.b16 %v54
    %v87 = vunpack.c.l.b16 %v55
    %v88 = vunpack.c.l.b16 %v56
    %v89 = vunpack.c.l.b16 %v57
    %v90 = vunpack.c.l.b16 %v58
    %v91 = vunpack.c.l.b16 %v59
    %v92 = vunpack.c.l.b16 %v60
    %v93 = vunpack.c.l.b16 %v61
    %v94 = vunpack.c.l.b16 %v62
    %v95 = vpack.c.b16 %v80, %v79
    %v96 = vpack.c.b16 %v82, %v81
    %v97 = vpack.c.b16 %v84, %v83
    %v98 = vpack.c.b16 %v86, %v85
    %v99 = vpack.c.b16 %v88, %v87
    %v100 = vpack.c.b16 %v90, %v89
    %v101 = vpack.c.b16 %v92, %v91
    %v102 = vpack.c.b16 %v94, %v93
    %111 = vmatprep.subr.bf16.mxu0 0
    %112 = vmatpush1.bf16.msra.mxu0 %v102
    %113 = vmatprep.subr.bf16.mxu0 0
    %114 = vmatpush1.bf16.msra.mxu0 %v101
    %115 = vmatprep.subr.bf16.mxu0 0
    %116 = vmatpush1.bf16.msra.mxu0 %v100
    %117 = vmatprep.subr.bf16.mxu0 0
    %118 = vmatpush1.bf16.msra.mxu0 %v99
    %119 = vmatprep.subr.bf16.mxu0 0
    %120 = vmatpush1.bf16.msra.mxu0 %v98
    %121 = vmatprep.subr.bf16.mxu0 0
    %122 = vmatpush1.bf16.msra.mxu0 %v97
    %123 = vmatprep.subr.bf16.mxu0 0
    %124 = vmatpush1.bf16.msra.mxu0 %v96
    %125 = vmatprep.subr.bf16.mxu0 0
    %126 = vmatpush1.bf16.msra.mxu0 %v95
    %127 = vmatprep.subr.bf16.mxu0 0
    %128 = vmatpush2.bf16.msra.mxu0 0
    %129 = vmatprep.subr.bf16.mxu0 0
    %130 = vmatpush2.bf16.msra.mxu0 0
    %131 = vmatprep.subr.bf16.mxu0 0
    %132 = vmatpush2.bf16.msra.mxu0 0
    %133 = vmatprep.subr.bf16.mxu0 0
    %134 = vmatpush2.bf16.msra.mxu0 0
    %135 = vmatprep.subr.bf16.mxu0 0
    %136 = vmatpush2.bf16.msra.mxu0 0
    %137 = vmatprep.subr.bf16.mxu0 0
    %138 = vmatpush2.bf16.msra.mxu0 0
    %139 = vmatprep.subr.bf16.mxu0 0
    %140 = vmatpush2.bf16.msra.mxu0 0
    %141 = vmatprep.subr.bf16.mxu0 0
    %142 = vmatpush2.bf16.msra.mxu0 0
    %143 = vmatprep.mubr.bf16.mxu0 0
    %144 = vmatmul.mubr.bf16.gmra.mxu0 %v46
    %v145 = vpop.f32.mrf.mxu0
    %v146 = vadd.f32 0.0, %v145
    %v147 = vpop.f32.mrf.mxu0
    %v148 = vpop.f32.mrf.mxu0
    %v149 = vadd.f32 0.0, %v148
    %v150 = vpop.f32.mrf.mxu0
    %151 = vdwg.mxu0
    %v152 = vadd.f32 %v42, %v146
    %v153 = vadd.f32 %v43, %v149
    %154 = vst [vmem:[%s3] sm:$0xff] %v152
    %155 = vst [vmem:[%s3 + $0x8] sm:$0xff] %v153
    // Predicated region
    $region22: #{_forward.1} parent=1 // pred_check
      _
    $region23: #{_forward.1} parent=1 // pred_check_branch
      %157 = sbr.rel (0) target = $region25
    $region24: #{_forward.1} parent=1 // pred_region
      _
    $region25: #{_forward.1} parent=1 // pred_fallthru
      _
    // Predicated region
    $region26: #{_forward.1} parent=1 // pred_check
      _
    $region27: #{_forward.1} parent=1 // pred_check_branch
      %159 = sbr.rel (0) target = $region29
    $region28: #{_forward.1} parent=1 // pred_region
      _
    $region29: #{_forward.1} parent=1 // pred_fallthru
      _
    %160 = vsyncpa [#allocation3], 1

</llo_original>
